<compile_context>
chip_gen: v7x
topology: tpu7x:2x2x1
jax: 0.10.0
libtpu: 0.0.40
codegen_flags: <defaults>
</compile_context>

<pallas_src>
import functools

import jax
import jax.numpy as jnp
from jax.experimental import pallas as pl
from jax.experimental.pallas import tpu as pltpu


def _round_up(v: int, m: int) -> int:
    return ((v + m - 1) // m) * m


def _graph_embedding_kernel(h0_hbm_ref, a_ref, wl_ref, bl_ref,   # inputs
                            h_ref,                               # output (resident h)
                            hw_ref,                              # scratch
                            *, row_tile: int, a_resident: bool):
    """One grid step = (layer l, node-row tile i).

    h0_hbm_ref : [N_pad, D_pad] f32   precomputed expansion output, stays in HBM
    a_ref      : streamed [row_tile, N_pad] tile OR resident [N_pad, N_pad] block
    wl_ref     : [D_pad, D_pad]       current layer GCN weight (bf16 fast / f32 exact)
    bl_ref     : [1, D_pad] f32       current layer GCN bias
    h_ref      : [N_pad, D_pad] f32   resident node embeddings == kernel output
    hw_ref     : [N_pad, D_pad]       per-layer snapshot of h @ W_l (MXU input dtype)
    """
    layer = pl.program_id(0)
    tile = pl.program_id(1)

    # --- one-time init: DMA the precomputed expansion output h0 into h --------
    # log(x+1) @ W_exp + b_exp is computed in the XLA wrapper, so the badly
    # shaped K=11 matmul never touches the kernel.  NOTE: in-kernel program
    # order guarantees the projection below sees this initialized h in the
    # same (layer==0, tile==0) grid step.
    @pl.when(jnp.logical_and(layer == 0, tile == 0))
    def _init():
        pltpu.sync_copy(h0_hbm_ref, h_ref)

    # --- once per layer: hW = h^{(l)} @ W_l (snapshot of the PRE-update h) ----
    # so the in-place per-row-tile residual updates below keep exact GCN
    # layer semantics.  bf16 x bf16 operands, f32 accumulation.
    @pl.when(tile == 0)
    def _project():
        hw_ref[...] = jnp.dot(h_ref[...].astype(wl_ref.dtype), wl_ref[...],
                              preferred_element_type=jnp.float32).astype(hw_ref.dtype)

    # --- per row tile: z = A[rows, :] @ hW + b_l ; h[rows] += relu(z) ---------
    row_start = pl.multiple_of(tile * row_tile, row_tile)
    rows = pl.ds(row_start, row_tile)
    a_tile = a_ref[rows, :] if a_resident else a_ref[...]
    a_tile = a_tile.astype(hw_ref.dtype)   # int8 tiles: dequant scale is folded into W_l
    z = jnp.dot(a_tile, hw_ref[...], preferred_element_type=jnp.float32) + bl_ref[...]
    h_ref[rows, :] = h_ref[rows, :] + jnp.maximum(z, 0.0)   # relu; dropout == identity (eval)


def graph_embedding(x, a_norm, pool, w_exp, b_exp, w_gcn, b_gcn, *,
                    row_tile: int = 256, d_pad_min: int = 128,
                    adjacency_mode: str = "int8",      # "int8" | "bf16" | "f32"
                    resident_a=None):
    """Pallas GraphEmbedding forward (eval). Returns [B, D] pooled graph embeddings."""
    n, f_in = x.shape
    num_layers, d, _ = w_gcn.shape

    d_pad = max(d_pad_min, _round_up(d, 128))      # lane-dense feature dim
    n_pad = _round_up(n, row_tile)                 # row-tile aligned node count
    num_tiles = n_pad // row_tile

    # --- expansion Linear hoisted out of the kernel ---------------------------
    # Padded rows of h0 are exactly zero; they accumulate only relu(b_l) terms
    # inside the kernel and are excluded from the pooling epilogue below.
    h0 = jnp.log(x + 1.0) @ w_exp + b_exp                          # [N, D] f32, tiny K=11
    h0p = jnp.zeros((n_pad, d_pad), jnp.float32).at[:n, :d].set(h0)

    # --- adjacency quantization / padding -------------------------------------
    # Zero-padding is exact: padded A rows/cols are 0, padded W/b columns are 0
    # (and stay 0 through relu + residual), so the first D output columns match.
    if adjacency_mode == "int8":
        a_scale = jnp.maximum(jnp.max(jnp.abs(a_norm)), 1e-12) / 127.0
        aq = jnp.clip(jnp.round(a_norm / a_scale), -127.0, 127.0).astype(jnp.int8)
        ap = jnp.zeros((n_pad, n_pad), jnp.int8).at[:n, :n].set(aq)
        # fold the dequant scale into W_l:  Aq @ (h @ (W*s)) == s*(Aq @ (h@W)) ~= A @ (h@W)
        w_eff = w_gcn * a_scale
        compute_dtype = jnp.bfloat16
    elif adjacency_mode == "bf16":
        ap = jnp.zeros((n_pad, n_pad), jnp.float32).at[:n, :n].set(a_norm).astype(jnp.bfloat16)
        w_eff = w_gcn
        compute_dtype = jnp.bfloat16
    elif adjacency_mode == "f32":
        ap = jnp.zeros((n_pad, n_pad), jnp.float32).at[:n, :n].set(a_norm)
        w_eff = w_gcn
        compute_dtype = jnp.float32
    else:
        raise ValueError(f"unknown adjacency_mode: {adjacency_mode}")

    wgp = jnp.zeros((num_layers, d_pad, d_pad), jnp.float32).at[:, :d, :d].set(w_eff)
    wgp = wgp.astype(compute_dtype)        # bf16 W_l -> single-pass MXU hW projection
    bgp = jnp.zeros((num_layers, 1, d_pad), jnp.float32).at[:, :, :d].set(b_gcn)

    a_itemsize = jnp.dtype(ap.dtype).itemsize
    c_itemsize = jnp.dtype(compute_dtype).itemsize

    # --- VMEM budget from the actual part (128 MiB v5e/v6e, 64 MiB v7x) --------
    try:
        vmem_cap = pltpu.get_tpu_info().vmem_capacity_bytes
    except Exception:
        vmem_cap = 64 * 1024 * 1024
    vmem_limit = min(int(vmem_cap * 0.85), 110 * 1024 * 1024)

    # Keep A fully VMEM-resident (fetched once instead of L times) when it fits
    # next to the resident h / hW scratch; otherwise stream row tiles from HBM.
    fixed_resident = 2 * n_pad * d_pad * 4 + n_pad * d_pad * c_itemsize
    if resident_a is None:
        resident_a = fixed_resident + 2 * n_pad * n_pad * a_itemsize <= int(0.75 * vmem_limit)

    if resident_a:
        a_spec = pl.BlockSpec((n_pad, n_pad), lambda l, i: (0, 0))
    else:
        # 3-deep A pipeline rides through the per-layer hW-projection bubble.
        try:
            a_spec = pl.BlockSpec((row_tile, n_pad), lambda l, i: (i, 0),
                                  pipeline_mode=pl.Buffered(3))
        except (TypeError, AttributeError):
            a_spec = pl.BlockSpec((row_tile, n_pad), lambda l, i: (i, 0))

    a_fetches = 1 if resident_a else num_layers
    cost = pl.CostEstimate(
        flops=2 * num_layers * (n_pad * n_pad * d_pad + n_pad * d_pad * d_pad),
        transcendentals=0,
        bytes_accessed=a_fetches * n_pad * n_pad * a_itemsize     # A (dominant term)
                       + 2 * n_pad * d_pad * 4                    # h0 in + h out
                       + num_layers * d_pad * (d_pad * c_itemsize + 4),  # W_l, b_l
    )

    kernel = functools.partial(_graph_embedding_kernel,
                               row_tile=row_tile, a_resident=bool(resident_a))

    h_out = pl.pallas_call(
        kernel,
        out_shape=jax.ShapeDtypeStruct((n_pad, d_pad), jnp.float32),
        grid_spec=pltpu.PrefetchScalarGridSpec(
            num_scalar_prefetch=0,
            grid=(num_layers, num_tiles),
            in_specs=[
                pl.BlockSpec(memory_space=pl.ANY),                            # h0 (HBM, one-shot DMA)
                a_spec,                                                       # A (resident or streamed)
                pl.BlockSpec((None, d_pad, d_pad), lambda l, i: (l, 0, 0)),   # W_l (per layer)
                pl.BlockSpec((None, 1, d_pad), lambda l, i: (l, 0, 0)),       # b_l (per layer)
            ],
            out_specs=pl.BlockSpec((n_pad, d_pad), lambda l, i: (0, 0)),      # resident h (accumulator)
            scratch_shapes=[pltpu.VMEM((n_pad, d_pad), compute_dtype)],       # hW snapshot
        ),
        compiler_params=pltpu.CompilerParams(
            dimension_semantics=("arbitrary", "arbitrary"),
            vmem_limit_bytes=vmem_limit,
        ),
        cost_estimate=cost,
    )(h0p, ap, wgp, bgp)

    # global_add_pool as a tiny XLA epilogue: the pool matrix never enters the
    # kernel (no per-step DMA), and padded node rows are excluded here so their
    # in-kernel bias accumulation is harmless.
    return pool @ h_out[:n, :d]


def build_dense_gcn_adjacency(edge_index, num_nodes):
    """edge_index: [2, E] int32 (src, dst). Dense improved-GCN normalized adjacency."""
    src, dst = edge_index[0], edge_index[1]
    a = jnp.zeros((num_nodes, num_nodes), jnp.float32)
    # message flows src -> dst, aggregated at dst:  out = A_norm @ x, A[dst, src] = 1
    a = a.at[dst, src].add(1.0)
    a = a + 2.0 * jnp.eye(num_nodes, dtype=jnp.float32)   # improved=True self loops
    deg = a.sum(axis=1)
    dinv = jnp.where(deg > 0, 1.0 / jnp.sqrt(deg), 0.0)
    return dinv[:, None] * a * dinv[None, :]


def build_pool_matrix(batch, batch_size):
    """batch: [N] graph-id per node -> one-hot pooling matrix [B, N]."""
    return (batch[None, :] == jnp.arange(batch_size)[:, None]).astype(jnp.float32)


if __name__ == "__main__":
    # --- small deterministic setup -------------------------------------------
    key = jax.random.PRNGKey(0)
    B = 2                       # batch_size (number of graphs)
    nodes_per_graph = 80        # 160 nodes total -> N_pad = 256
    N = B * nodes_per_graph
    F_IN = 11                   # fixed atom feature size of the module
    D = 32                      # vector_dim (small)
    L = 5                       # num_conv_layers (module default)

    k_x, k_we, k_be, k_wg, k_bg = jax.random.split(key, 5)

    # non-negative atom features (log(x+1) requires x >= 0)
    x = jax.random.uniform(k_x, (N, F_IN), jnp.float32, 0.0, 3.0)

    # chain graph inside each molecule, both edge directions
    srcs, dsts = [], []
    for g in range(B):
        base = g * nodes_per_graph
        for i in range(nodes_per_graph - 1):
            srcs += [base + i, base + i + 1]
            dsts += [base + i + 1, base + i]
    edge_index = jnp.array([srcs, dsts], dtype=jnp.int32)
    batch_vec = jnp.repeat(jnp.arange(B, dtype=jnp.int32), nodes_per_graph)

    a_norm = build_dense_gcn_adjacency(edge_index, N)
    pool = build_pool_matrix(batch_vec, B)

    # deterministic parameter init (synthetic weights, not a checkpoint)
    w_exp = jax.random.normal(k_we, (F_IN, D), jnp.float32) * 0.1
    b_exp = jax.random.normal(k_be, (1, D), jnp.float32) * 0.01
    w_gcn = jax.random.normal(k_wg, (L, D, D), jnp.float32) * 0.05
    b_gcn = jax.random.normal(k_bg, (L, 1, D), jnp.float32) * 0.01

    # --- run Pallas kernel -----------------------------------------------------
    # fast path: int8-quantized A (VMEM-resident when it fits), bf16 hW, f32 accumulation
    out_i8 = jax.block_until_ready(
        graph_embedding(x, a_norm, pool, w_exp, b_exp, w_gcn, b_gcn))
    # exact path: f32, streamed multi-tile A (tight structural check of the pipelined path)
    out_f32 = jax.block_until_ready(
        graph_embedding(x, a_norm, pool, w_exp, b_exp, w_gcn, b_gcn,
                        adjacency_mode="f32", row_tile=128, resident_a=False))

    # --- reference check in plain JAX -----------------------------------------
    h = jnp.log(x + 1.0) @ w_exp + b_exp
    for layer in range(L):
        z = a_norm @ (h @ w_gcn[layer]) + b_gcn[layer]
        h = h + jnp.maximum(z, 0.0)
    ref = pool @ h

    assert out_i8.shape == (B, D) and out_f32.shape == (B, D)
    # f32 streamed path matches the f32 reference tightly
    assert jnp.allclose(out_f32, ref, atol=2e-3, rtol=2e-3)
    # int8-A / bf16-hW path: small per-layer quantization noise, f32 accumulation kept
    rel = jnp.linalg.norm(out_i8 - ref) / jnp.linalg.norm(ref)
    assert rel < 2e-2, f"int8 path relative error too large: {float(rel)}"

    print("KERNEL_OK")
</pallas_src>

<mosaic_0001>
module attributes {stable_mosaic.version = 11 : i64} {
  func.func @_graph_embedding_kernel(%arg0: i32, %arg1: i32, %arg2: memref<256x128xf32, #tpu.memory_space<any>>, %arg3: memref<256x256xi8, #tpu.memory_space<vmem>>, %arg4: memref<1x128x128xbf16, #tpu.memory_space<vmem>>, %arg5: memref<1x1x128xf32, #tpu.memory_space<vmem>>, %arg6: memref<256x128xf32, #tpu.memory_space<vmem>>, %arg7: memref<256x128xbf16, #tpu.memory_space<vmem>>) attributes {dimension_semantics = [#tpu.dimension_semantics<arbitrary>, #tpu.dimension_semantics<arbitrary>], iteration_bounds = array<i64: 5, 1>, scalar_prefetch = 0 : i64, scratch_operands = 1 : i64, tpu.core_type = #tpu.core_type<tc>, window_params = [{}, {pipeline_mode = #tpu.pipeline_mode<synchronous>, transform_indices = @transform_1, window_bounds = array<i64: 256, 256>}, {transform_indices = @transform_2, window_bounds = array<i64: 1, 128, 128>}, {transform_indices = @transform_3, window_bounds = array<i64: 1, 1, 128>}, {pipeline_mode = #tpu.pipeline_mode<synchronous>, transform_indices = @transform_4, window_bounds = array<i64: 256, 128>}]} {
    %c0_i32 = arith.constant 0 : i32
    %0 = arith.cmpi eq, %arg0, %c0_i32 : i32
    %c0_i32_0 = arith.constant 0 : i32
    %1 = arith.cmpi eq, %arg1, %c0_i32_0 : i32
    %2 = arith.andi %0, %1 : i1
    %3 = arith.extui %2 : i1 to i32
    %c0_i32_1 = arith.constant 0 : i32
    %4 = arith.cmpi ne, %3, %c0_i32_1 : i32
    scf.if %4 {
      "tpu.region"() ({
        %26 = tpu.sem_alloc : memref<!tpu.dma_semaphore, #tpu.memory_space<semaphore_mem>>
        tpu.enqueue_dma source(%arg2 : memref<256x128xf32, #tpu.memory_space<any>>) target(%arg6 : memref<256x128xf32, #tpu.memory_space<vmem>>) target_semaphore(%26 : memref<!tpu.dma_semaphore, #tpu.memory_space<semaphore_mem>>)
        tpu.wait_dma2 semaphore(%26 : memref<!tpu.dma_semaphore, #tpu.memory_space<semaphore_mem>>) src(%arg2 : memref<256x128xf32, #tpu.memory_space<any>>) dst(%arg6 : memref<256x128xf32, #tpu.memory_space<vmem>>)
        tpu.yield
      }) : () -> ()
    } else {
    }
    %c0_i32_2 = arith.constant 0 : i32
    %5 = arith.cmpi eq, %arg1, %c0_i32_2 : i32
    %6 = arith.extui %5 : i1 to i32
    %c0_i32_3 = arith.constant 0 : i32
    %7 = arith.cmpi ne, %6, %c0_i32_3 : i32
    scf.if %7 {
      %c0_12 = arith.constant 0 : index
      %c0_13 = arith.constant 0 : index
      %26 = vector.load %arg6[%c0_12, %c0_13] : memref<256x128xf32, #tpu.memory_space<vmem>>, vector<256x128xf32>
      %27 = arith.truncf %26 : vector<256x128xf32> to vector<256x128xbf16>
      %c0_14 = arith.constant 0 : index
      %c0_15 = arith.constant 0 : index
      %c0_16 = arith.constant 0 : index
      %28 = vector.load %arg4[%c0_14, %c0_15, %c0_16] : memref<1x128x128xbf16, #tpu.memory_space<vmem>>, vector<1x128x128xbf16>
      %29 = vector.shape_cast %28 : vector<1x128x128xbf16> to vector<128x128xbf16>
      %cst_17 = arith.constant dense<0.000000e+00> : vector<256x128xf32>
      %30 = tpu.matmul %27, %29, %cst_17 {dimension_numbers = #tpu.dot_dimension_numbers<[1], [0], [0], [1], [0, 0, 1, 1], [], []>} : vector<256x128xbf16>, vector<128x128xbf16>, vector<256x128xf32> -> vector<256x128xf32>
      %31 = arith.truncf %30 : vector<256x128xf32> to vector<256x128xbf16>
      %c0_18 = arith.constant 0 : index
      %c0_19 = arith.constant 0 : index
      %32 = vector.load %arg7[%c0_18, %c0_19] : memref<256x128xbf16, #tpu.memory_space<vmem>>, vector<256x128xbf16>
      tpu.vector_store %arg7[%c0_18, %c0_19], %31 {strides = array<i32>} : memref<256x128xbf16, #tpu.memory_space<vmem>>, vector<256x128xbf16>,
    } else {
    }
    %c256_i32 = arith.constant 256 : i32
    %8 = arith.muli %arg1, %c256_i32 : i32
    %9 = tpu.assume_multiple %8, 256 : i32
    %10 = arith.index_cast %9 : i32 to index
    %c0 = arith.constant 0 : index
    %11 = vector.load %arg3[%10, %c0] : memref<256x256xi8, #tpu.memory_space<vmem>>, vector<256x256xi8>
    %12 = arith.sitofp %11 : vector<256x256xi8> to vector<256x256xbf16>
    %c0_4 = arith.constant 0 : index
    %c0_5 = arith.constant 0 : index
    %13 = vector.load %arg7[%c0_4, %c0_5] : memref<256x128xbf16, #tpu.memory_space<vmem>>, vector<256x128xbf16>
    %cst = arith.constant dense<0.000000e+00> : vector<256x128xf32>
    %14 = tpu.matmul %12, %13, %cst {dimension_numbers = #tpu.dot_dimension_numbers<[1], [0], [0], [1], [0, 0, 1, 1], [], []>} : vector<256x256xbf16>, vector<256x128xbf16>, vector<256x128xf32> -> vector<256x128xf32>
    %c0_6 = arith.constant 0 : index
    %c0_7 = arith.constant 0 : index
    %c0_8 = arith.constant 0 : index
    %15 = vector.load %arg5[%c0_6, %c0_7, %c0_8] : memref<1x1x128xf32, #tpu.memory_space<vmem>>, vector<1x1x128xf32>
    %16 = vector.shape_cast %15 : vector<1x1x128xf32> to vector<1x128xf32>
    %17 = vector.broadcast %16 : vector<1x128xf32> to vector<256x128xf32>
    %18 = arith.addf %14, %17 : vector<256x128xf32>
    %19 = arith.index_cast %9 : i32 to index
    %c0_9 = arith.constant 0 : index
    %20 = vector.load %arg6[%19, %c0_9] : memref<256x128xf32, #tpu.memory_space<vmem>>, vector<256x128xf32>
    %cst_10 = arith.constant 0.000000e+00 : f32
    %21 = vector.broadcast %cst_10 : f32 to vector<256x128xf32>
    %22 = arith.maximumf %18, %21 : vector<256x128xf32>
    %23 = arith.addf %20, %22 : vector<256x128xf32>
    %24 = arith.index_cast %9 : i32 to index
    %c0_11 = arith.constant 0 : index
    %25 = vector.load %arg6[%24, %c0_11] : memref<256x128xf32, #tpu.memory_space<vmem>>, vector<256x128xf32>
    tpu.vector_store %arg6[%24, %c0_11], %23 {strides = array<i32>} : memref<256x128xf32, #tpu.memory_space<vmem>>, vector<256x128xf32>,
    return
  }
  func.func @transform_1(%arg0: i32, %arg1: i32) -> (i32, i32) {
    %c0_i32 = arith.constant 0 : i32
    %c0_i32_0 = arith.constant 0 : i32
    %c0_i32_1 = arith.constant 0 : i32
    return %c0_i32, %c0_i32_0 : i32, i32
  }
  func.func @transform_2(%arg0: i32, %arg1: i32) -> (i32, i32, i32) {
    %c0_i32 = arith.constant 0 : i32
    %c0_i32_0 = arith.constant 0 : i32
    %c0_i32_1 = arith.constant 0 : i32
    return %arg0, %c0_i32, %c0_i32_0 : i32, i32, i32
  }
  func.func @transform_3(%arg0: i32, %arg1: i32) -> (i32, i32, i32) {
    %c0_i32 = arith.constant 0 : i32
    %c0_i32_0 = arith.constant 0 : i32
    %c0_i32_1 = arith.constant 0 : i32
    return %arg0, %c0_i32, %c0_i32_0 : i32, i32, i32
  }
  func.func @transform_4(%arg0: i32, %arg1: i32) -> (i32, i32) {
    %c0_i32 = arith.constant 0 : i32
    %c0_i32_0 = arith.constant 0 : i32
    %c0_i32_1 = arith.constant 0 : i32
    return %c0_i32, %c0_i32_0 : i32, i32
  }
}

</mosaic_0001>

<llo_original>
// kernel: tpu_custom_call.1
$region0: #{tpu_custom_call.1}
  #allocation0 [shape = 'u32[]', space=smem, size = 0x4, offset = 0x4, fixed_abs, tag = 'smem constant byte address 0x4 - core index']
  #allocation1 [shape = 'u32[144,128]{1,0:T(1,128)}', space=vmem, size = 0x12000, scoped, tag = 'internal scratch']
  #allocation2 [shape = 'bf16[256,128]{1,0:T(16,128)(2,1)}', space=vmem, size = 0x10000, scoped, tag = 'scratch operand']
  #allocation10 [shape = 's32[]', space=sflag, size = 0x4, offset = 0, fixed_abs, tag = 'sflag constant byte address 0x0 - dummy sync flag']
  #allocation11 [shape = 's32[]', space=sflag, size = 0x4, offset = 0, fixed_abs, tag = 'sflag constant byte address 0x0 - dummy sync flag']
  #allocation12 [shape = 'u32[]', space=smem, size = 0x4, offset = 0x44, fixed_abs, tag = 'smem constant byte address 0x44 - assertion arg 0']
  #allocation13 [shape = 'u32[]', space=smem, size = 0x4, offset = 0x48, fixed_abs, tag = 'smem constant byte address 0x48 - assertion arg 1']
  %s0 = inlined_call_operand.hbm [shape: f32[256,128], index: 0, kind: input, shape index: {}]
  %s1 = inlined_call_operand.hbm [shape: s8[256,256], index: 1, kind: input, shape index: {}]
  %s2 = inlined_call_operand.hbm [shape: bf16[5,128,128], index: 2, kind: input, shape index: {}]
  %s3 = inlined_call_operand.vmem [shape: f32[5,1,128], index: 3, kind: input, shape index: {}]
  %s4 = inlined_call_operand.hbm [shape: f32[256,128], index: 4, kind: output, shape index: {}]
  %s5 = sld [smem:[#allocation0]]
  $region66: #{tpu_custom_call.1} parent=0
    _
  %s7 = ssub.s32 1, %s5
  %s8 = scalar_select 0, %s7, %s5
  $region1: #{tpu_custom_call.1} parent=0
    #allocation3 [shape = 'u8[65536]{0}', space=vmem, size = 0x10000, scoped, tag = 'input window, operand 1, single buffered']
    #allocation4 [shape = 's32[2]{0}', space=sflag, size = 0x8, scoped, tag = 'scoped memory for tpu_custom_call.1']
    #allocation5 [shape = 's32[2]{0}', space=sflag, size = 0x8, scoped, tag = 'scoped memory for tpu_custom_call.1']
    #allocation6 [shape = 'u8[65536]{0}', space=vmem, size = 0x10000, scoped, tag = 'input window, operand 2']
    #allocation7 [shape = 's32[2]{0}', space=sflag, size = 0x8, scoped, tag = 'scoped memory for tpu_custom_call.1']
    #allocation8 [shape = 'u8[131072]{0}', space=vmem, size = 0x20000, scoped, tag = 'output window, operand 0, single buffered']
    %9 = vsyncpa [#allocation4], 0
    %10 = vsyncpa [#allocation7], 0
    %s11 = scalar_lea.sflag [#allocation7], 1
    %12 = vsyncpa %s11, 0
    %13 = vsyncpa [#allocation5], 0
    loop: start=0, step=1, limit=7
    $region2: #{tpu_custom_call.1} parent=1 // loop_pre_header
      _
    $region3: #{tpu_custom_call.1} parent=1 // loop_header
      %s15 = sphi 0, %s19
      %p16 = scmp.ge.s32.totalorder %s15, 7
      %s22 = sphi 0, %s34
      %s23 = sphi 0, %s30
      %s24 = sphi 0, %s22
      %s25 = sphi 0, %s23
      %s26 = sphi 0, %s24
      %s27 = sphi 0, %s25
      %s35 = sphi 0, %s35
      %s37 = sphi 0, %s35
      %s38 = sphi 0, %s37
      %s52 = sphi 0, %s38
      %s58 = sphi 0, %s60
      %s61 = sphi 0, %s58
      %s62 = sphi 0, %s61
      %s78 = sphi 0, %s62
      %s84 = sphi 0, %s86
      %s87 = sphi 0, %s84
      %s88 = sphi 0, %s87
      %s104 = sphi 0, %s88
      %s108 = sphi 0, %s108
      %s110 = sphi 0, %s108
      %s111 = sphi 0, %s110
      %s125 = sphi 0, %s111
    $region4: #{tpu_custom_call.1} parent=1 // loop_header_branch
      %18 = sbr.rel (%p16) target = $region8
    $region5: #{tpu_custom_call.1} parent=1 // loop_body
      %s20 = ssub.s32 %s15, 1
      %s21 = ssub.s32 %s15, 2
      %s28 = sadd.s32 1, %s23
      %p29 = scmp.ge.s32.totalorder %s28, 1
      %s30 = scalar_select %p29, 0, %s28
      %s31 = sadd.s32 1, %s22
      %s32 = scalar_select %p29, %s31, %s22
      %p33 = scmp.ge.s32.totalorder %s32, 5
      %s34 = scalar_select %p33, 0, %s32
      %s36 = sadd.s32 %s35, 1
      %p39 = scmp.eq.s32.totalorder %s15, 4
      %p40 = scmp.ne.s32.totalorder %s35, %s37
      %p41 = scmp.eq.s32.totalorder %s15, 0
      %p42 = por %p40, %p41
      %p43 = scmp.ne.s32.totalorder %s35, %s37
      %p44 = scmp.eq.s32.totalorder %s20, 4
      %p45 = por %p43, %p44
      %p46 = scmp.ne.s32.totalorder %s37, %s38
      %p47 = scmp.eq.s32.totalorder %s20, 0
      %p48 = por %p46, %p47
      %p49 = scmp.ne.s32.totalorder %s37, %s38
      %p50 = scmp.eq.s32.totalorder %s21, 4
      %p51 = por %p49, %p50
      %p53 = scmp.ne.s32.totalorder %s38, %s52
      %p54 = scmp.eq.s32.totalorder %s21, 0
      %p55 = por %p53, %p54
      %s56 = ssub.s32 %s22, %s34
      %p57 = scmp.eq.s32.totalorder %s56, 0
      %s59 = sadd.s32 %s58, 1
      %s60 = scalar_select %p57, %s58, %s59
      %p63 = pneg %p57
      %p64 = scmp.eq.s32.totalorder %s15, 4
      %p65 = por %p63, %p64
      %p66 = scmp.ne.s32.totalorder %s58, %s61
      %p67 = scmp.eq.s32.totalorder %s15, 0
      %p68 = por %p66, %p67
      %p69 = scmp.ne.s32.totalorder %s58, %s61
      %p70 = scmp.eq.s32.totalorder %s20, 4
      %p71 = por %p69, %p70
      %p72 = scmp.ne.s32.totalorder %s61, %s62
      %p73 = scmp.eq.s32.totalorder %s20, 0
      %p74 = por %p72, %p73
      %p75 = scmp.ne.s32.totalorder %s61, %s62
      %p76 = scmp.eq.s32.totalorder %s21, 4
      %p77 = por %p75, %p76
      %p79 = scmp.ne.s32.totalorder %s62, %s78
      %p80 = scmp.eq.s32.totalorder %s21, 0
      %p81 = por %p79, %p80
      %s82 = ssub.s32 %s22, %s34
      %p83 = scmp.eq.s32.totalorder %s82, 0
      %s85 = sadd.s32 %s84, 1
      %s86 = scalar_select %p83, %s84, %s85
      %p89 = pneg %p83
      %p90 = scmp.eq.s32.totalorder %s15, 4
      %p91 = por %p89, %p90
      %p92 = scmp.ne.s32.totalorder %s84, %s87
      %p93 = scmp.eq.s32.totalorder %s15, 0
      %p94 = por %p92, %p93
      %p95 = scmp.ne.s32.totalorder %s84, %s87
      %p96 = scmp.eq.s32.totalorder %s20, 4
      %p97 = por %p95, %p96
      %p98 = scmp.ne.s32.totalorder %s87, %s88
      %p99 = scmp.eq.s32.totalorder %s20, 0
      %p100 = por %p98, %p99
      %p101 = scmp.ne.s32.totalorder %s87, %s88
      %p102 = scmp.eq.s32.totalorder %s21, 4
      %p103 = por %p101, %p102
      %p105 = scmp.ne.s32.totalorder %s88, %s104
      %p106 = scmp.eq.s32.totalorder %s21, 0
      %p107 = por %p105, %p106
      %s109 = sadd.s32 %s108, 1
      %p112 = scmp.eq.s32.totalorder %s15, 4
      %p113 = scmp.ne.s32.totalorder %s108, %s110
      %p114 = scmp.eq.s32.totalorder %s15, 0
      %p115 = por %p113, %p114
      %p116 = scmp.ne.s32.totalorder %s108, %s110
      %p117 = scmp.eq.s32.totalorder %s20, 4
      %p118 = por %p116, %p117
      %p119 = scmp.ne.s32.totalorder %s110, %s111
      %p120 = scmp.eq.s32.totalorder %s20, 0
      %p121 = por %p119, %p120
      %p122 = scmp.ne.s32.totalorder %s110, %s111
      %p123 = scmp.eq.s32.totalorder %s21, 4
      %p124 = por %p122, %p123
      %p126 = scmp.ne.s32.totalorder %s111, %s125
      %p127 = scmp.eq.s32.totalorder %s21, 0
      %p128 = por %p126, %p127
      %p129 = scmp.le.s32.totalorder 1, %s15
      %p130 = scmp.lt.s32.totalorder %s15, 6
      %p131 = pnand %p129, %p130
      %p132 = pneg %p131
      // Predicated region
      $region9: #{tpu_custom_call.1} parent=5 // pred_check
        _
      $region10: #{tpu_custom_call.1} parent=5 // pred_check_branch
        %134 = sbr.rel (%p131) target = $region12
      $region11: #{tpu_custom_call.1} parent=5 // pred_region
        %s135 = ssub.s32 %s15, 1
        // Predicated region
        $region13: #{tpu_custom_call.1} parent=11 // pred_check
          %p136 = pneg %p48
        $region14: #{tpu_custom_call.1} parent=11 // pred_check_branch
          %138 = sbr.rel (%p136) target = $region16
        $region15: #{tpu_custom_call.1} parent=11 // pred_region
          %s140 = ssub.s32 2048, 2048
          %141 = vsyncadd [#allocation4], %s140
          %s142 = sshll.u32 [#allocation3], 4
          %s143 = int_to_ptr.vmem [resolvable:$true] %s142
          %148 = dma.hbm_to_vmem [thread:$0]  %s1, 2048, %s143, [#allocation4], 256, 256, 16
        $region16: #{tpu_custom_call.1} parent=11 // pred_fallthru
          _
      $region12: #{tpu_custom_call.1} parent=5 // pred_fallthru
        _
      %p149 = scmp.lt.s32.totalorder %s15, 5
      // Predicated region
      $region17: #{tpu_custom_call.1} parent=5 // pred_check
        %p150 = pneg %p149
      $region18: #{tpu_custom_call.1} parent=5 // pred_check_branch
        %152 = sbr.rel (%p150) target = $region20
      $region19: #{tpu_custom_call.1} parent=5 // pred_region
        // Predicated region
        $region21: #{tpu_custom_call.1} parent=19 // pred_check
          %p153 = pneg %p68
        $region22: #{tpu_custom_call.1} parent=19 // pred_check_branch
          %155 = sbr.rel (%p153) target = $region24
        $region23: #{tpu_custom_call.1} parent=19 // pred_region
          %s156 = sand.u32 %s58, 1
          %s157 = scalar_lea.sflag [#allocation7], %s156
          %s158 = sand.u32 %s58, 1
          %s159 = smul.addr %s158, 64
          %s160 = scalar_lea.vmem [#allocation6], %s159
          %s162 = ssub.s32 1024, 1024
          %163 = vsyncadd %s157, %s162
          %s164 = smul.addr %s22, 16
          %s165 = smul.addr %s164, 64
          %s166 = scalar_lea.hbm %s2, %s165
          %s167 = sshll.u32 %s160, 4
          %s168 = int_to_ptr.vmem [resolvable:$true] %s167
          %173 = dma.hbm_to_vmem [thread:$0]  %s166, 1024, %s168, %s157, 64, 64, 4
        $region24: #{tpu_custom_call.1} parent=19 // pred_fallthru
          _
        // Predicated region
        $region25: #{tpu_custom_call.1} parent=19 // pred_check
          %p174 = pneg %p94
        $region26: #{tpu_custom_call.1} parent=19 // pred_check_branch
          %176 = sbr.rel (%p174) target = $region28
        $region27: #{tpu_custom_call.1} parent=19 // pred_region
          %p177 = scmp.lt.s32.totalorder %s22, 4
          %s178 = scalar_select %p177, %s22, 4
          %s179 = scalar_lea.vmem %s3, %s178
        $region28: #{tpu_custom_call.1} parent=19 // pred_fallthru
          _
      $region20: #{tpu_custom_call.1} parent=5 // pred_fallthru
        _
      %p180 = scmp.le.s32.totalorder 1, %s15
      %p181 = scmp.lt.s32.totalorder %s15, 6
      %p182 = pnand %p180, %p181
      %p183 = pneg %p182
      // Predicated region
      $region29: #{tpu_custom_call.1} parent=5 // pred_check
        _
      $region30: #{tpu_custom_call.1} parent=5 // pred_check_branch
        %185 = sbr.rel (%p182) target = $region32
      $region31: #{tpu_custom_call.1} parent=5 // pred_region
        %s186 = ssub.s32 %s15, 1
        // Predicated region
        $region33: #{tpu_custom_call.1} parent=31 // pred_check
          %p187 = pneg %p48
        $region34: #{tpu_custom_call.1} parent=31 // pred_check_branch
          %189 = sbr.rel (%p187) target = $region36
        $region35: #{tpu_custom_call.1} parent=31 // pred_region
          %190 = dma.done [#allocation4], 2048
        $region36: #{tpu_custom_call.1} parent=31 // pred_fallthru
          _
        %s191 = sand.u32 %s61, 1
        %s192 = scalar_lea.sflag [#allocation7], %s191
        %s193 = sand.u32 %s61, 1
        %s194 = smul.addr %s193, 64
        %s195 = scalar_lea.vmem [#allocation6], %s194
        // Predicated region
        $region37: #{tpu_custom_call.1} parent=31 // pred_check
          %p196 = pneg %p74
        $region38: #{tpu_custom_call.1} parent=31 // pred_check_branch
          %198 = sbr.rel (%p196) target = $region40
        $region39: #{tpu_custom_call.1} parent=31 // pred_region
          %199 = dma.done %s192, 1024
        $region40: #{tpu_custom_call.1} parent=31 // pred_fallthru
          _
        %p200 = pneg %p48
        %p201 = pneg %p45
        %s202 = sand.u32 %s61, 1
        %s203 = scalar_lea.sflag [#allocation7], %s202
        %s204 = sand.u32 %s61, 1
        %s205 = smul.addr %s204, 64
        %s206 = scalar_lea.vmem [#allocation6], %s205
        %p207 = pneg %p74
        %p208 = pneg %p71
        %p209 = scmp.lt.s32.totalorder %s24, 4
        %s210 = scalar_select %p209, %s24, 4
        %s211 = scalar_lea.vmem %s3, %s210
        %p212 = pneg %p100
        %p213 = pneg %p97
        %p214 = pneg %p121
        %p215 = pneg %p118
        %p216 = scmp.lt.s32.totalorder %s24, 4
        %s217 = scalar_select %p216, %s24, 4
        %s218 = scalar_lea.vmem %s3, %s217
        %p220 = scmp.eq.s32.totalorder %s24, 0
        %p221 = scmp.eq.s32.totalorder %s25, 0
        %p222 = pnand %p220, %p221
        %p223 = pneg %p222
        // Predicated region
        $region41: #{tpu_custom_call.1} parent=31 // pred_check
          _
        $region42: #{tpu_custom_call.1} parent=31 // pred_check_branch
          %225 = sbr.rel (%p222) target = $region44
        $region43: #{tpu_custom_call.1} parent=31 // pred_region
          $region45: #{tpu_custom_call.1} parent=43
            #allocation9 [shape = 's32[1]{0}', space=sflag, size = 0x4, scoped, tag = 'scoped memory for tpu_custom_call.1']
            // Predicated region
            $region46: #{tpu_custom_call.1} parent=45 // pred_check
              _
            $region47: #{tpu_custom_call.1} parent=45 // pred_check_branch
              %227 = sbr.rel target = $region49
            $region48: #{tpu_custom_call.1} parent=45 // pred_region
              %228 = sst [smem:[#allocation12]] [#allocation11]
              %229 = sst [smem:[#allocation13]] [#allocation10]
            $region49: #{tpu_custom_call.1} parent=45 // pred_fallthru
              _
            %231 = shalt.err (0)
            %s233 = sshll.u32 [#allocation8], 4
            %s234 = int_to_ptr.vmem [resolvable:$true] %s233
            %236 = dma.hbm_to_vmem [thread:$0]  %s0, 4096, %s234, [#allocation9]
            %s237 = smul.u32 256, 1
            %s238 = sshll.u32 %s237, 4
            %239 = dma.done [#allocation9], %s238
        $region44: #{tpu_custom_call.1} parent=31 // pred_fallthru
          _
        // Predicated region
        $region50: #{tpu_custom_call.1} parent=31 // pred_check
          %p240 = pneg %p221
        $region51: #{tpu_custom_call.1} parent=31 // pred_check_branch
          %242 = sbr.rel (%p240) target = $region53
        $region52: #{tpu_custom_call.1} parent=31 // pred_region
          %v243 = vld [vmem:[#allocation8] sm:$0xff]
          %v244 = vld [vmem:[#allocation8 + $0x8] sm:$0xff]
          %v245 = vld [vmem:[#allocation8 + $0x10] sm:$0xff]
          %v246 = vld [vmem:[#allocation8 + $0x18] sm:$0xff]
          %v247 = vld [vmem:[#allocation8 + $0x20] sm:$0xff]
          %v248 = vld [vmem:[#allocation8 + $0x28] sm:$0xff]
          %v249 = vld [vmem:[#allocation8 + $0x30] sm:$0xff]
          %v250 = vld [vmem:[#allocation8 + $0x38] sm:$0xff]
          %v251 = vld [vmem:[#allocation8 + $0x40] sm:$0xff]
          %v252 = vld [vmem:[#allocation8 + $0x48] sm:$0xff]
          %v253 = vld [vmem:[#allocation8 + $0x50] sm:$0xff]
          %v254 = vld [vmem:[#allocation8 + $0x58] sm:$0xff]
          %v255 = vld [vmem:[#allocation8 + $0x60] sm:$0xff]
          %v256 = vld [vmem:[#allocation8 + $0x68] sm:$0xff]
          %v257 = vld [vmem:[#allocation8 + $0x70] sm:$0xff]
          %v258 = vld [vmem:[#allocation8 + $0x78] sm:$0xff]
          %v259 = vld [vmem:[#allocation8 + $0x80] sm:$0xff]
          %v260 = vld [vmem:[#allocation8 + $0x88] sm:$0xff]
          %v261 = vld [vmem:[#allocation8 + $0x90] sm:$0xff]
          %v262 = vld [vmem:[#allocation8 + $0x98] sm:$0xff]
          %v263 = vld [vmem:[#allocation8 + $0xa0] sm:$0xff]
          %v264 = vld [vmem:[#allocation8 + $0xa8] sm:$0xff]
          %v265 = vld [vmem:[#allocation8 + $0xb0] sm:$0xff]
          %v266 = vld [vmem:[#allocation8 + $0xb8] sm:$0xff]
          %v267 = vld [vmem:[#allocation8 + $0xc0] sm:$0xff]
          %v268 = vld [vmem:[#allocation8 + $0xc8] sm:$0xff]
          %v269 = vld [vmem:[#allocation8 + $0xd0] sm:$0xff]
          %v270 = vld [vmem:[#allocation8 + $0xd8] sm:$0xff]
          %v271 = vld [vmem:[#allocation8 + $0xe0] sm:$0xff]
          %v272 = vld [vmem:[#allocation8 + $0xe8] sm:$0xff]
          %v273 = vld [vmem:[#allocation8 + $0xf0] sm:$0xff]
          %v274 = vld [vmem:[#allocation8 + $0xf8] sm:$0xff]
          %v275 = vpack.c.bf16 %v244, %v243
          %v276 = vpack.c.bf16 %v246, %v245
          %v277 = vpack.c.bf16 %v248, %v247
          %v278 = vpack.c.bf16 %v250, %v249
          %v279 = vpack.c.bf16 %v252, %v251
          %v280 = vpack.c.bf16 %v254, %v253
          %v281 = vpack.c.bf16 %v256, %v255
          %v282 = vpack.c.bf16 %v258, %v257
          %v283 = vpack.c.bf16 %v260, %v259
          %v284 = vpack.c.bf16 %v262, %v261
          %v285 = vpack.c.bf16 %v264, %v263
          %v286 = vpack.c.bf16 %v266, %v265
          %v287 = vpack.c.bf16 %v268, %v267
          %v288 = vpack.c.bf16 %v270, %v269
          %v289 = vpack.c.bf16 %v272, %v271
          %v290 = vpack.c.bf16 %v274, %v273
          %v291 = vld [vmem:[%s195] sm:$0xf]
          %v292 = vld [vmem:[%s195 + $0x4] sm:$0xf]
          %v293 = vld [vmem:[%s195 + $0x8] sm:$0xf]
          %v294 = vld [vmem:[%s195 + $0xc] sm:$0xf]
          %v295 = vld [vmem:[%s195 + $0x10] sm:$0xf]
          %v296 = vld [vmem:[%s195 + $0x14] sm:$0xf]
          %v297 = vld [vmem:[%s195 + $0x18] sm:$0xf]
          %v298 = vld [vmem:[%s195 + $0x1c] sm:$0xf]
          %v299 = vld [vmem:[%s195 + $0x20] sm:$0xf]
          %v300 = vld [vmem:[%s195 + $0x24] sm:$0xf]
          %v301 = vld [vmem:[%s195 + $0x28] sm:$0xf]
          %v302 = vld [vmem:[%s195 + $0x2c] sm:$0xf]
          %v303 = vld [vmem:[%s195 + $0x30] sm:$0xf]
          %v304 = vld [vmem:[%s195 + $0x34] sm:$0xf]
          %v305 = vld [vmem:[%s195 + $0x38] sm:$0xf]
          %v306 = vld [vmem:[%s195 + $0x3c] sm:$0xf]
          %v323 = vunpack.c.l.b16 %v291
          %v324 = vunpack.c.l.b16 %v292
          %v325 = vunpack.c.l.b16 %v293
          %v326 = vunpack.c.l.b16 %v294
          %v327 = vunpack.c.l.b16 %v295
          %v328 = vunpack.c.l.b16 %v296
          %v329 = vunpack.c.l.b16 %v297
          %v330 = vunpack.c.l.b16 %v298
          %v331 = vunpack.c.l.b16 %v299
          %v332 = vunpack.c.l.b16 %v300
          %v333 = vunpack.c.l.b16 %v301
          %v334 = vunpack.c.l.b16 %v302
          %v335 = vunpack.c.l.b16 %v303
          %v336 = vunpack.c.l.b16 %v304
          %v337 = vunpack.c.l.b16 %v305
          %v338 = vunpack.c.l.b16 %v306
          %v339 = vpack.c.b16 %v324, %v323
          %v340 = vpack.c.b16 %v326, %v325
          %v341 = vpack.c.b16 %v328, %v327
          %v342 = vpack.c.b16 %v330, %v329
          %v343 = vpack.c.b16 %v332, %v331
          %v344 = vpack.c.b16 %v334, %v333
          %v345 = vpack.c.b16 %v336, %v335
          %v346 = vpack.c.b16 %v338, %v337
          %355 = vmatprep.subr.bf16.mxu0 0
          %356 = vmatpush1.bf16.msra.mxu0 %v339
          %357 = vmatprep.subr.bf16.mxu0 0
          %358 = vmatpush1.bf16.msra.mxu0 %v340
          %359 = vmatprep.subr.bf16.mxu0 0
          %360 = vmatpush1.bf16.msra.mxu0 %v341
          %361 = vmatprep.subr.bf16.mxu0 0
          %362 = vmatpush1.bf16.msra.mxu0 %v342
          %363 = vmatprep.subr.bf16.mxu0 0
          %364 = vmatpush1.bf16.msra.mxu0 %v343
          %365 = vmatprep.subr.bf16.mxu0 0
          %366 = vmatpush1.bf16.msra.mxu0 %v344
          %367 = vmatprep.subr.bf16.mxu0 0
          %368 = vmatpush1.bf16.msra.mxu0 %v345
          %369 = vmatprep.subr.bf16.mxu0 0
          %370 = vmatpush1.bf16.msra.mxu0 %v346
          %371 = vmatprep.subr.bf16.mxu0 0
          %372 = vmatpush1.bf16.msra.mxu0 0
          %373 = vmatprep.subr.bf16.mxu0 0
          %374 = vmatpush1.bf16.msra.mxu0 0
          %375 = vmatprep.subr.bf16.mxu0 0
          %376 = vmatpush1.bf16.msra.mxu0 0
          %377 = vmatprep.subr.bf16.mxu0 0
          %378 = vmatpush1.bf16.msra.mxu0 0
          %379 = vmatprep.subr.bf16.mxu0 0
          %380 = vmatpush1.bf16.msra.mxu0 0
          %381 = vmatprep.subr.bf16.mxu0 0
          %382 = vmatpush1.bf16.msra.mxu0 0
          %383 = vmatprep.subr.bf16.mxu0 0
          %384 = vmatpush1.bf16.msra.mxu0 0
          %385 = vmatprep.subr.bf16.mxu0 0
          %386 = vmatpush1.bf16.msra.mxu0 0
          %387 = vmatprep.mubr.bf16.mxu0 0
          %388 = vmatmul.mubr.bf16.gmra.mrb[0].mxu0 %v275
          %v389 = vpop.f32.mrb[0].mxu0
          %v390 = vadd.f32 0.0, %v389
          %v391 = vpop.f32.mrb[0].mxu0
          %v392 = vpop.f32.mrb[0].mxu0
          %v393 = vadd.f32 0.0, %v392
          %v394 = vpop.f32.mrb[0].mxu0
          %395 = vmatprep.mubr.bf16.mxu0 0
          %396 = vmatmul.mubr.bf16.gmra.mrb[0].mxu0 %v276
          %v397 = vpop.f32.mrb[0].mxu0
          %v398 = vadd.f32 0.0, %v397
          %v399 = vpop.f32.mrb[0].mxu0
          %v400 = vpop.f32.mrb[0].mxu0
          %v401 = vadd.f32 0.0, %v400
          %v402 = vpop.f32.mrb[0].mxu0
          %403 = vmatprep.mubr.bf16.mxu0 0
          %404 = vmatmul.mubr.bf16.gmra.mrb[0].mxu0 %v277
          %v405 = vpop.f32.mrb[0].mxu0
          %v406 = vadd.f32 0.0, %v405
          %v407 = vpop.f32.mrb[0].mxu0
          %v408 = vpop.f32.mrb[0].mxu0
          %v409 = vadd.f32 0.0, %v408
          %v410 = vpop.f32.mrb[0].mxu0
          %411 = vmatprep.mubr.bf16.mxu0 0
          %412 = vmatmul.mubr.bf16.gmra.mrb[0].mxu0 %v278
          %v413 = vpop.f32.mrb[0].mxu0
          %v414 = vadd.f32 0.0, %v413
          %v415 = vpop.f32.mrb[0].mxu0
          %v416 = vpop.f32.mrb[0].mxu0
          %v417 = vadd.f32 0.0, %v416
          %v418 = vpop.f32.mrb[0].mxu0
          %419 = vmatprep.mubr.bf16.mxu0 0
          %420 = vmatmul.mubr.bf16.gmra.mrb[0].mxu0 %v279
          %v421 = vpop.f32.mrb[0].mxu0
          %v422 = vadd.f32 0.0, %v421
          %v423 = vpop.f32.mrb[0].mxu0
          %v424 = vpop.f32.mrb[0].mxu0
          %v425 = vadd.f32 0.0, %v424
          %v426 = vpop.f32.mrb[0].mxu0
          %427 = vmatprep.mubr.bf16.mxu0 0
          %428 = vmatmul.mubr.bf16.gmra.mrb[0].mxu0 %v280
          %v429 = vpop.f32.mrb[0].mxu0
          %v430 = vadd.f32 0.0, %v429
          %v431 = vpop.f32.mrb[0].mxu0
          %v432 = vpop.f32.mrb[0].mxu0
          %v433 = vadd.f32 0.0, %v432
          %v434 = vpop.f32.mrb[0].mxu0
          %435 = vmatprep.mubr.bf16.mxu0 0
          %436 = vmatmul.mubr.bf16.gmra.mrb[0].mxu0 %v281
          %v437 = vpop.f32.mrb[0].mxu0
          %v438 = vadd.f32 0.0, %v437
          %v439 = vpop.f32.mrb[0].mxu0
          %v440 = vpop.f32.mrb[0].mxu0
          %v441 = vadd.f32 0.0, %v440
          %v442 = vpop.f32.mrb[0].mxu0
          %443 = vmatprep.mubr.bf16.mxu0 0
          %444 = vmatmul.mubr.bf16.gmra.mrb[0].mxu0 %v282
          %v445 = vpop.f32.mrb[0].mxu0
          %v446 = vadd.f32 0.0, %v445
          %v447 = vpop.f32.mrb[0].mxu0
          %v448 = vpop.f32.mrb[0].mxu0
          %v449 = vadd.f32 0.0, %v448
          %v450 = vpop.f32.mrb[0].mxu0
          %451 = vmatprep.mubr.bf16.mxu0 0
          %452 = vmatmul.mubr.bf16.gmra.mrb[0].mxu0 %v283
          %v453 = vpop.f32.mrb[0].mxu0
          %v454 = vadd.f32 0.0, %v453
          %v455 = vpop.f32.mrb[0].mxu0
          %v456 = vpop.f32.mrb[0].mxu0
          %v457 = vadd.f32 0.0, %v456
          %v458 = vpop.f32.mrb[0].mxu0
          %459 = vmatprep.mubr.bf16.mxu0 0
          %460 = vmatmul.mubr.bf16.gmra.mrb[0].mxu0 %v284
          %v461 = vpop.f32.mrb[0].mxu0
          %v462 = vadd.f32 0.0, %v461
          %v463 = vpop.f32.mrb[0].mxu0
          %v464 = vpop.f32.mrb[0].mxu0
          %v465 = vadd.f32 0.0, %v464
          %v466 = vpop.f32.mrb[0].mxu0
          %467 = vmatprep.mubr.bf16.mxu0 0
          %468 = vmatmul.mubr.bf16.gmra.mrb[0].mxu0 %v285
          %v469 = vpop.f32.mrb[0].mxu0
          %v470 = vadd.f32 0.0, %v469
          %v471 = vpop.f32.mrb[0].mxu0
          %v472 = vpop.f32.mrb[0].mxu0
          %v473 = vadd.f32 0.0, %v472
          %v474 = vpop.f32.mrb[0].mxu0
          %475 = vmatprep.mubr.bf16.mxu0 0
          %476 = vmatmul.mubr.bf16.gmra.mrb[0].mxu0 %v286
          %v477 = vpop.f32.mrb[0].mxu0
          %v478 = vadd.f32 0.0, %v477
          %v479 = vpop.f32.mrb[0].mxu0
          %v480 = vpop.f32.mrb[0].mxu0
          %v481 = vadd.f32 0.0, %v480
          %v482 = vpop.f32.mrb[0].mxu0
          %483 = vmatprep.mubr.bf16.mxu0 0
          %484 = vmatmul.mubr.bf16.gmra.mrb[0].mxu0 %v287
          %v485 = vpop.f32.mrb[0].mxu0
          %v486 = vadd.f32 0.0, %v485
          %v487 = vpop.f32.mrb[0].mxu0
          %v488 = vpop.f32.mrb[0].mxu0
          %v489 = vadd.f32 0.0, %v488
          %v490 = vpop.f32.mrb[0].mxu0
          %491 = vmatprep.mubr.bf16.mxu0 0
          %492 = vmatmul.mubr.bf16.gmra.mrb[0].mxu0 %v288
          %v493 = vpop.f32.mrb[0].mxu0
          %v494 = vadd.f32 0.0, %v493
          %v495 = vpop.f32.mrb[0].mxu0
          %v496 = vpop.f32.mrb[0].mxu0
          %v497 = vadd.f32 0.0, %v496
          %v498 = vpop.f32.mrb[0].mxu0
          %499 = vmatprep.mubr.bf16.mxu0 0
          %500 = vmatmul.mubr.bf16.gmra.mrb[0].mxu0 %v289
          %v501 = vpop.f32.mrb[0].mxu0
          %v502 = vadd.f32 0.0, %v501
          %v503 = vpop.f32.mrb[0].mxu0
          %v504 = vpop.f32.mrb[0].mxu0
          %v505 = vadd.f32 0.0, %v504
          %v506 = vpop.f32.mrb[0].mxu0
          %507 = vmatprep.mubr.bf16.mxu0 0
          %508 = vmatmul.mubr.bf16.gmra.mrb[0].mxu0 %v290
          %v509 = vpop.f32.mrb[0].mxu0
          %v510 = vadd.f32 0.0, %v509
          %v511 = vpop.f32.mrb[0].mxu0
          %v512 = vpop.f32.mrb[0].mxu0
          %v513 = vadd.f32 0.0, %v512
          %v514 = vpop.f32.mrb[0].mxu0
          %515 = vdwg.mxu0
          %v516 = vpack.c.bf16 %v393, %v390
          %v517 = vpack.c.bf16 %v401, %v398
          %v518 = vpack.c.bf16 %v409, %v406
          %v519 = vpack.c.bf16 %v417, %v414
          %v520 = vpack.c.bf16 %v425, %v422
          %v521 = vpack.c.bf16 %v433, %v430
          %v522 = vpack.c.bf16 %v441, %v438
          %v523 = vpack.c.bf16 %v449, %v446
          %v524 = vpack.c.bf16 %v457, %v454
          %v525 = vpack.c.bf16 %v465, %v462
          %v526 = vpack.c.bf16 %v473, %v470
          %v527 = vpack.c.bf16 %v481, %v478
          %v528 = vpack.c.bf16 %v489, %v486
          %v529 = vpack.c.bf16 %v497, %v494
          %v530 = vpack.c.bf16 %v505, %v502
          %v531 = vpack.c.bf16 %v513, %v510
          %532 = vst [vmem:[#allocation2] sm:$0xff] %v516
          %533 = vst [vmem:[#allocation2 + $0x8] sm:$0xff] %v517
          %534 = vst [vmem:[#allocation2 + $0x10] sm:$0xff] %v518
          %535 = vst [vmem:[#allocation2 + $0x18] sm:$0xff] %v519
          %536 = vst [vmem:[#allocation2 + $0x20] sm:$0xff] %v520
          %537 = vst [vmem:[#allocation2 + $0x28] sm:$0xff] %v521
          %538 = vst [vmem:[#allocation2 + $0x30] sm:$0xff] %v522
          %539 = vst [vmem:[#allocation2 + $0x38] sm:$0xff] %v523
          %540 = vst [vmem:[#allocation2 + $0x40] sm:$0xff] %v524
          %541 = vst [vmem:[#allocation2 + $0x48] sm:$0xff] %v525
          %542 = vst [vmem:[#allocation2 + $0x50] sm:$0xff] %v526
          %543 = vst [vmem:[#allocation2 + $0x58] sm:$0xff] %v527
          %544 = vst [vmem:[#allocation2 + $0x60] sm:$0xff] %v528
          %545 = vst [vmem:[#allocation2 + $0x68] sm:$0xff] %v529
          %546 = vst [vmem:[#allocation2 + $0x70] sm:$0xff] %v530
          %547 = vst [vmem:[#allocation2 + $0x78] sm:$0xff] %v531
        $region53: #{tpu_custom_call.1} parent=31 // pred_fallthru
          _
        %s548 = smul.u32 %s25, 256
        %s549 = sshra.s32 %s548, 5
        %s550 = sand.u32 %s548, 31
        %s551 = smul.u32 %s549, 2
        %s552 = smul.addr %s551, 8
        %s553 = scalar_lea.vmem [#allocation3], %s552
        %v554 = vld [vmem:[%s553] sm:$0xff]
        %v555 = vld [vmem:[%s553 + $0x8] sm:$0xff]
        %v556 = vld [vmem:[%s553 + $0x10] sm:$0xff]
        %v557 = vld [vmem:[%s553 + $0x18] sm:$0xff]
        %v558 = vld [vmem:[%s553 + $0x20] sm:$0xff]
        %v559 = vld [vmem:[%s553 + $0x28] sm:$0xff]
        %v560 = vld [vmem:[%s553 + $0x30] sm:$0xff]
        %v561 = vld [vmem:[%s553 + $0x38] sm:$0xff]
        %v562 = vld [vmem:[%s553 + $0x40] sm:$0xff]
        %v563 = vld [vmem:[%s553 + $0x48] sm:$0xff]
        %v564 = vld [vmem:[%s553 + $0x50] sm:$0xff]
        %v565 = vld [vmem:[%s553 + $0x58] sm:$0xff]
        %v566 = vld [vmem:[%s553 + $0x60] sm:$0xff]
        %v567 = vld [vmem:[%s553 + $0x68] sm:$0xff]
        %v568 = vld [vmem:[%s553 + $0x70] sm:$0xff]
        %v569 = vld [vmem:[%s553 + $0x78] sm:$0xff]
        %v570 = vunpack.c.l.s8.bf16 %v554
        %v571 = vunpack.c.l.s8.bf16 %v555
        %v572 = vunpack.c.h.s8.bf16 %v554
        %v573 = vunpack.c.h.s8.bf16 %v555
        %v574 = vunpack.c.l.s8.bf16 %v556
        %v575 = vunpack.c.l.s8.bf16 %v557
        %v576 = vunpack.c.h.s8.bf16 %v556
        %v577 = vunpack.c.h.s8.bf16 %v557
        %v578 = vunpack.c.l.s8.bf16 %v558
        %v579 = vunpack.c.l.s8.bf16 %v559
        %v580 = vunpack.c.h.s8.bf16 %v558
        %v581 = vunpack.c.h.s8.bf16 %v559
        %v582 = vunpack.c.l.s8.bf16 %v560
        %v583 = vunpack.c.l.s8.bf16 %v561
        %v584 = vunpack.c.h.s8.bf16 %v560
        %v585 = vunpack.c.h.s8.bf16 %v561
        %v586 = vunpack.c.l.s8.bf16 %v562
        %v587 = vunpack.c.l.s8.bf16 %v563
        %v588 = vunpack.c.h.s8.bf16 %v562
        %v589 = vunpack.c.h.s8.bf16 %v563
        %v590 = vunpack.c.l.s8.bf16 %v564
        %v591 = vunpack.c.l.s8.bf16 %v565
        %v592 = vunpack.c.h.s8.bf16 %v564
        %v593 = vunpack.c.h.s8.bf16 %v565
        %v594 = vunpack.c.l.s8.bf16 %v566
        %v595 = vunpack.c.l.s8.bf16 %v567
        %v596 = vunpack.c.h.s8.bf16 %v566
        %v597 = vunpack.c.h.s8.bf16 %v567
        %v598 = vunpack.c.l.s8.bf16 %v568
        %v599 = vunpack.c.l.s8.bf16 %v569
        %v600 = vunpack.c.h.s8.bf16 %v568
        %v601 = vunpack.c.h.s8.bf16 %v569
        %v602 = vld [vmem:[#allocation2] sm:$0xff]
        %v603 = vld [vmem:[#allocation2 + $0x8] sm:$0xff]
        %v604 = vld [vmem:[#allocation2 + $0x10] sm:$0xff]
        %v605 = vld [vmem:[#allocation2 + $0x18] sm:$0xff]
        %v606 = vld [vmem:[#allocation2 + $0x20] sm:$0xff]
        %v607 = vld [vmem:[#allocation2 + $0x28] sm:$0xff]
        %v608 = vld [vmem:[#allocation2 + $0x30] sm:$0xff]
        %v609 = vld [vmem:[#allocation2 + $0x38] sm:$0xff]
        %v610 = vld [vmem:[#allocation2 + $0x40] sm:$0xff]
        %v611 = vld [vmem:[#allocation2 + $0x48] sm:$0xff]
        %v612 = vld [vmem:[#allocation2 + $0x50] sm:$0xff]
        %v613 = vld [vmem:[#allocation2 + $0x58] sm:$0xff]
        %v614 = vld [vmem:[#allocation2 + $0x60] sm:$0xff]
        %v615 = vld [vmem:[#allocation2 + $0x68] sm:$0xff]
        %v616 = vld [vmem:[#allocation2 + $0x70] sm:$0xff]
        %v617 = vld [vmem:[#allocation2 + $0x78] sm:$0xff]
        %v618 = vld [vmem:[%s218] sm:$0x1]
        %v620 = vlaneseq
        %v621 = vshrl.u32 %v620, 7
        %v622 = vsub.s32 0, %v621
        %v623 = vrot.slane %v618, %v622
        %625 = vmatprep.subr.bf16.mxu0 0
        %626 = vmatpush1.bf16.msra.mxu0 %v602
        %627 = vmatprep.subr.bf16.mxu0 0
        %628 = vmatpush1.bf16.msra.mxu0 %v603
        %629 = vmatprep.subr.bf16.mxu0 0
        %630 = vmatpush1.bf16.msra.mxu0 %v604
        %631 = vmatprep.subr.bf16.mxu0 0
        %632 = vmatpush1.bf16.msra.mxu0 %v605
        %633 = vmatprep.subr.bf16.mxu0 0
        %634 = vmatpush1.bf16.msra.mxu0 %v606
        %635 = vmatprep.subr.bf16.mxu0 0
        %636 = vmatpush1.bf16.msra.mxu0 %v607
        %637 = vmatprep.subr.bf16.mxu0 0
        %638 = vmatpush1.bf16.msra.mxu0 %v608
        %639 = vmatprep.subr.bf16.mxu0 0
        %640 = vmatpush1.bf16.msra.mxu0 %v609
        %641 = vmatprep.subr.bf16.mxu0 0
        %642 = vmatpush1.bf16.msra.mxu0 %v610
        %643 = vmatprep.subr.bf16.mxu0 0
        %644 = vmatpush1.bf16.msra.mxu0 %v611
        %645 = vmatprep.subr.bf16.mxu0 0
        %646 = vmatpush1.bf16.msra.mxu0 %v612
        %647 = vmatprep.subr.bf16.mxu0 0
        %648 = vmatpush1.bf16.msra.mxu0 %v613
        %649 = vmatprep.subr.bf16.mxu0 0
        %650 = vmatpush1.bf16.msra.mxu0 %v614
        %651 = vmatprep.subr.bf16.mxu0 0
        %652 = vmatpush1.bf16.msra.mxu0 %v615
        %653 = vmatprep.subr.bf16.mxu0 0
        %654 = vmatpush1.bf16.msra.mxu0 %v616
        %655 = vmatprep.subr.bf16.mxu0 0
        %656 = vmatpush1.bf16.msra.mxu0 %v617
        %657 = vmatprep.mubr.bf16.mxu0 %v571
        %658 = vmatmul.mubr.bf16.gmra.mrb[0].mxu0 %v570
        %v659 = vpop.f32.mrb[0].mxu0
        %v660 = vadd.f32 %v623, %v659
        %v661 = vpop.f32.mrb[0].mxu0
        %v662 = vpop.f32.mrb[0].mxu0
        %v663 = vadd.f32 %v623, %v662
        %v664 = vpop.f32.mrb[0].mxu0
        %665 = vmatprep.mubr.bf16.mxu0 %v573
        %666 = vmatmul.mubr.bf16.gmra.mrb[0].mxu0 %v572
        %v667 = vpop.f32.mrb[0].mxu0
        %v668 = vadd.f32 %v623, %v667
        %v669 = vpop.f32.mrb[0].mxu0
        %v670 = vpop.f32.mrb[0].mxu0
        %v671 = vadd.f32 %v623, %v670
        %v672 = vpop.f32.mrb[0].mxu0
        %673 = vmatprep.mubr.bf16.mxu0 %v575
        %674 = vmatmul.mubr.bf16.gmra.mrb[0].mxu0 %v574
        %v675 = vpop.f32.mrb[0].mxu0
        %v676 = vadd.f32 %v623, %v675
        %v677 = vpop.f32.mrb[0].mxu0
        %v678 = vpop.f32.mrb[0].mxu0
        %v679 = vadd.f32 %v623, %v678
        %v680 = vpop.f32.mrb[0].mxu0
        %681 = vmatprep.mubr.bf16.mxu0 %v577
        %682 = vmatmul.mubr.bf16.gmra.mrb[0].mxu0 %v576
        %v683 = vpop.f32.mrb[0].mxu0
        %v684 = vadd.f32 %v623, %v683
        %v685 = vpop.f32.mrb[0].mxu0
        %v686 = vpop.f32.mrb[0].mxu0
        %v687 = vadd.f32 %v623, %v686
        %v688 = vpop.f32.mrb[0].mxu0
        %689 = vmatprep.mubr.bf16.mxu0 %v579
        %690 = vmatmul.mubr.bf16.gmra.mrb[0].mxu0 %v578
        %v691 = vpop.f32.mrb[0].mxu0
        %v692 = vadd.f32 %v623, %v691
        %v693 = vpop.f32.mrb[0].mxu0
        %v694 = vpop.f32.mrb[0].mxu0
        %v695 = vadd.f32 %v623, %v694
        %v696 = vpop.f32.mrb[0].mxu0
        %697 = vmatprep.mubr.bf16.mxu0 %v581
        %698 = vmatmul.mubr.bf16.gmra.mrb[0].mxu0 %v580
        %v699 = vpop.f32.mrb[0].mxu0
        %v700 = vadd.f32 %v623, %v699
        %v701 = vpop.f32.mrb[0].mxu0
        %v702 = vpop.f32.mrb[0].mxu0
        %v703 = vadd.f32 %v623, %v702
        %v704 = vpop.f32.mrb[0].mxu0
        %705 = vmatprep.mubr.bf16.mxu0 %v583
        %706 = vmatmul.mubr.bf16.gmra.mrb[0].mxu0 %v582
        %v707 = vpop.f32.mrb[0].mxu0
        %v708 = vadd.f32 %v623, %v707
        %v709 = vpop.f32.mrb[0].mxu0
        %v710 = vpop.f32.mrb[0].mxu0
        %v711 = vadd.f32 %v623, %v710
        %v712 = vpop.f32.mrb[0].mxu0
        %713 = vmatprep.mubr.bf16.mxu0 %v585
        %714 = vmatmul.mubr.bf16.gmra.mrb[0].mxu0 %v584
        %v715 = vpop.f32.mrb[0].mxu0
        %v716 = vadd.f32 %v623, %v715
        %v717 = vpop.f32.mrb[0].mxu0
        %v718 = vpop.f32.mrb[0].mxu0
        %v719 = vadd.f32 %v623, %v718
        %v720 = vpop.f32.mrb[0].mxu0
        %721 = vmatprep.mubr.bf16.mxu0 %v587
        %722 = vmatmul.mubr.bf16.gmra.mrb[0].mxu0 %v586
        %v723 = vpop.f32.mrb[0].mxu0
        %v724 = vadd.f32 %v623, %v723
        %v725 = vpop.f32.mrb[0].mxu0
        %v726 = vpop.f32.mrb[0].mxu0
        %v727 = vadd.f32 %v623, %v726
        %v728 = vpop.f32.mrb[0].mxu0
        %729 = vmatprep.mubr.bf16.mxu0 %v589
        %730 = vmatmul.mubr.bf16.gmra.mrb[0].mxu0 %v588
        %v731 = vpop.f32.mrb[0].mxu0
        %v732 = vadd.f32 %v623, %v731
        %v733 = vpop.f32.mrb[0].mxu0
        %v734 = vpop.f32.mrb[0].mxu0
        %v735 = vadd.f32 %v623, %v734
        %v736 = vpop.f32.mrb[0].mxu0
        %737 = vmatprep.mubr.bf16.mxu0 %v591
        %738 = vmatmul.mubr.bf16.gmra.mrb[0].mxu0 %v590
        %v739 = vpop.f32.mrb[0].mxu0
        %v740 = vadd.f32 %v623, %v739
        %v741 = vpop.f32.mrb[0].mxu0
        %v742 = vpop.f32.mrb[0].mxu0
        %v743 = vadd.f32 %v623, %v742
        %v744 = vpop.f32.mrb[0].mxu0
        %745 = vmatprep.mubr.bf16.mxu0 %v593
        %746 = vmatmul.mubr.bf16.gmra.mrb[0].mxu0 %v592
        %v747 = vpop.f32.mrb[0].mxu0
        %v748 = vadd.f32 %v623, %v747
        %v749 = vpop.f32.mrb[0].mxu0
        %v750 = vpop.f32.mrb[0].mxu0
        %v751 = vadd.f32 %v623, %v750
        %v752 = vpop.f32.mrb[0].mxu0
        %753 = vmatprep.mubr.bf16.mxu0 %v595
        %754 = vmatmul.mubr.bf16.gmra.mrb[0].mxu0 %v594
        %v755 = vpop.f32.mrb[0].mxu0
        %v756 = vadd.f32 %v623, %v755
        %v757 = vpop.f32.mrb[0].mxu0
        %v758 = vpop.f32.mrb[0].mxu0
        %v759 = vadd.f32 %v623, %v758
        %v760 = vpop.f32.mrb[0].mxu0
        %761 = vmatprep.mubr.bf16.mxu0 %v597
        %762 = vmatmul.mubr.bf16.gmra.mrb[0].mxu0 %v596
        %v763 = vpop.f32.mrb[0].mxu0
        %v764 = vadd.f32 %v623, %v763
        %v765 = vpop.f32.mrb[0].mxu0
        %v766 = vpop.f32.mrb[0].mxu0
        %v767 = vadd.f32 %v623, %v766
        %v768 = vpop.f32.mrb[0].mxu0
        %769 = vmatprep.mubr.bf16.mxu0 %v599
        %770 = vmatmul.mubr.bf16.gmra.mrb[0].mxu0 %v598
        %v771 = vpop.f32.mrb[0].mxu0
        %v772 = vadd.f32 %v623, %v771
        %v773 = vpop.f32.mrb[0].mxu0
        %v774 = vpop.f32.mrb[0].mxu0
        %v775 = vadd.f32 %v623, %v774
        %v776 = vpop.f32.mrb[0].mxu0
        %777 = vmatprep.mubr.bf16.mxu0 %v601
        %778 = vmatmul.mubr.bf16.gmra.mrb[0].mxu0 %v600
        %v779 = vpop.f32.mrb[0].mxu0
        %v780 = vadd.f32 %v623, %v779
        %v781 = vpop.f32.mrb[0].mxu0
        %v782 = vpop.f32.mrb[0].mxu0
        %v783 = vadd.f32 %v623, %v782
        %v784 = vpop.f32.mrb[0].mxu0
        %785 = vdwg.mxu0
        %s786 = scalar_lea.vmem [#allocation8], %s548
        %v787 = vld [vmem:[%s786] sm:$0xff]
        %v788 = vld [vmem:[%s786 + $0x8] sm:$0xff]
        %v789 = vld [vmem:[%s786 + $0x10] sm:$0xff]
        %v790 = vld [vmem:[%s786 + $0x18] sm:$0xff]
        %v791 = vld [vmem:[%s786 + $0x20] sm:$0xff]
        %v792 = vld [vmem:[%s786 + $0x28] sm:$0xff]
        %v793 = vld [vmem:[%s786 + $0x30] sm:$0xff]
        %v794 = vld [vmem:[%s786 + $0x38] sm:$0xff]
        %v795 = vld [vmem:[%s786 + $0x40] sm:$0xff]
        %v796 = vld [vmem:[%s786 + $0x48] sm:$0xff]
        %v797 = vld [vmem:[%s786 + $0x50] sm:$0xff]
        %v798 = vld [vmem:[%s786 + $0x58] sm:$0xff]
        %v799 = vld [vmem:[%s786 + $0x60] sm:$0xff]
        %v800 = vld [vmem:[%s786 + $0x68] sm:$0xff]
        %v801 = vld [vmem:[%s786 + $0x70] sm:$0xff]
        %v802 = vld [vmem:[%s786 + $0x78] sm:$0xff]
        %v803 = vld [vmem:[%s786 + $0x80] sm:$0xff]
        %v804 = vld [vmem:[%s786 + $0x88] sm:$0xff]
        %v805 = vld [vmem:[%s786 + $0x90] sm:$0xff]
        %v806 = vld [vmem:[%s786 + $0x98] sm:$0xff]
        %v807 = vld [vmem:[%s786 + $0xa0] sm:$0xff]
        %v808 = vld [vmem:[%s786 + $0xa8] sm:$0xff]
        %v809 = vld [vmem:[%s786 + $0xb0] sm:$0xff]
        %v810 = vld [vmem:[%s786 + $0xb8] sm:$0xff]
        %v811 = vld [vmem:[%s786 + $0xc0] sm:$0xff]
        %v812 = vld [vmem:[%s786 + $0xc8] sm:$0xff]
        %v813 = vld [vmem:[%s786 + $0xd0] sm:$0xff]
        %v814 = vld [vmem:[%s786 + $0xd8] sm:$0xff]
        %v815 = vld [vmem:[%s786 + $0xe0] sm:$0xff]
        %v816 = vld [vmem:[%s786 + $0xe8] sm:$0xff]
        %v817 = vld [vmem:[%s786 + $0xf0] sm:$0xff]
        %v818 = vld [vmem:[%s786 + $0xf8] sm:$0xff]
        %v819 = vmax.f32 %v660, 0.0
        %v820 = vmax.f32 %v663, 0.0
        %v821 = vmax.f32 %v668, 0.0
        %v822 = vmax.f32 %v671, 0.0
        %v823 = vmax.f32 %v676, 0.0
        %v824 = vmax.f32 %v679, 0.0
        %v825 = vmax.f32 %v684, 0.0
        %v826 = vmax.f32 %v687, 0.0
        %v827 = vmax.f32 %v692, 0.0
        %v828 = vmax.f32 %v695, 0.0
        %v829 = vmax.f32 %v700, 0.0
        %v830 = vmax.f32 %v703, 0.0
        %v831 = vmax.f32 %v708, 0.0
        %v832 = vmax.f32 %v711, 0.0
        %v833 = vmax.f32 %v716, 0.0
        %v834 = vmax.f32 %v719, 0.0
        %v835 = vmax.f32 %v724, 0.0
        %v836 = vmax.f32 %v727, 0.0
        %v837 = vmax.f32 %v732, 0.0
        %v838 = vmax.f32 %v735, 0.0
        %v839 = vmax.f32 %v740, 0.0
        %v840 = vmax.f32 %v743, 0.0
        %v841 = vmax.f32 %v748, 0.0
        %v842 = vmax.f32 %v751, 0.0
        %v843 = vmax.f32 %v756, 0.0
        %v844 = vmax.f32 %v759, 0.0
        %v845 = vmax.f32 %v764, 0.0
        %v846 = vmax.f32 %v767, 0.0
        %v847 = vmax.f32 %v772, 0.0
        %v848 = vmax.f32 %v775, 0.0
        %v849 = vmax.f32 %v780, 0.0
        %v850 = vmax.f32 %v783, 0.0
        %v851 = vadd.f32 %v787, %v819
        %v852 = vadd.f32 %v788, %v820
        %v853 = vadd.f32 %v789, %v821
        %v854 = vadd.f32 %v790, %v822
        %v855 = vadd.f32 %v791, %v823
        %v856 = vadd.f32 %v792, %v824
        %v857 = vadd.f32 %v793, %v825
        %v858 = vadd.f32 %v794, %v826
        %v859 = vadd.f32 %v795, %v827
        %v860 = vadd.f32 %v796, %v828
        %v861 = vadd.f32 %v797, %v829
        %v862 = vadd.f32 %v798, %v830
        %v863 = vadd.f32 %v799, %v831
        %v864 = vadd.f32 %v800, %v832
        %v865 = vadd.f32 %v801, %v833
        %v866 = vadd.f32 %v802, %v834
        %v867 = vadd.f32 %v803, %v835
        %v868 = vadd.f32 %v804, %v836
        %v869 = vadd.f32 %v805, %v837
        %v870 = vadd.f32 %v806, %v838
        %v871 = vadd.f32 %v807, %v839
        %v872 = vadd.f32 %v808, %v840
        %v873 = vadd.f32 %v809, %v841
        %v874 = vadd.f32 %v810, %v842
        %v875 = vadd.f32 %v811, %v843
        %v876 = vadd.f32 %v812, %v844
        %v877 = vadd.f32 %v813, %v845
        %v878 = vadd.f32 %v814, %v846
        %v879 = vadd.f32 %v815, %v847
        %v880 = vadd.f32 %v816, %v848
        %v881 = vadd.f32 %v817, %v849
        %v882 = vadd.f32 %v818, %v850
        %883 = vst [vmem:[%s786] sm:$0xff] %v851
        %884 = vst [vmem:[%s786 + $0x8] sm:$0xff] %v852
        %885 = vst [vmem:[%s786 + $0x10] sm:$0xff] %v853
        %886 = vst [vmem:[%s786 + $0x18] sm:$0xff] %v854
        %887 = vst [vmem:[%s786 + $0x20] sm:$0xff] %v855
        %888 = vst [vmem:[%s786 + $0x28] sm:$0xff] %v856
        %889 = vst [vmem:[%s786 + $0x30] sm:$0xff] %v857
        %890 = vst [vmem:[%s786 + $0x38] sm:$0xff] %v858
        %891 = vst [vmem:[%s786 + $0x40] sm:$0xff] %v859
        %892 = vst [vmem:[%s786 + $0x48] sm:$0xff] %v860
        %893 = vst [vmem:[%s786 + $0x50] sm:$0xff] %v861
        %894 = vst [vmem:[%s786 + $0x58] sm:$0xff] %v862
        %895 = vst [vmem:[%s786 + $0x60] sm:$0xff] %v863
        %896 = vst [vmem:[%s786 + $0x68] sm:$0xff] %v864
        %897 = vst [vmem:[%s786 + $0x70] sm:$0xff] %v865
        %898 = vst [vmem:[%s786 + $0x78] sm:$0xff] %v866
        %899 = vst [vmem:[%s786 + $0x80] sm:$0xff] %v867
        %900 = vst [vmem:[%s786 + $0x88] sm:$0xff] %v868
        %901 = vst [vmem:[%s786 + $0x90] sm:$0xff] %v869
        %902 = vst [vmem:[%s786 + $0x98] sm:$0xff] %v870
        %903 = vst [vmem:[%s786 + $0xa0] sm:$0xff] %v871
        %904 = vst [vmem:[%s786 + $0xa8] sm:$0xff] %v872
        %905 = vst [vmem:[%s786 + $0xb0] sm:$0xff] %v873
        %906 = vst [vmem:[%s786 + $0xb8] sm:$0xff] %v874
        %907 = vst [vmem:[%s786 + $0xc0] sm:$0xff] %v875
        %908 = vst [vmem:[%s786 + $0xc8] sm:$0xff] %v876
        %909 = vst [vmem:[%s786 + $0xd0] sm:$0xff] %v877
        %910 = vst [vmem:[%s786 + $0xd8] sm:$0xff] %v878
        %911 = vst [vmem:[%s786 + $0xe0] sm:$0xff] %v879
        %912 = vst [vmem:[%s786 + $0xe8] sm:$0xff] %v880
        %913 = vst [vmem:[%s786 + $0xf0] sm:$0xff] %v881
        %914 = vst [vmem:[%s786 + $0xf8] sm:$0xff] %v882
        // Predicated region
        $region54: #{tpu_custom_call.1} parent=31 // pred_check
          %p915 = pneg %p118
        $region55: #{tpu_custom_call.1} parent=31 // pred_check_branch
          %917 = sbr.rel (%p915) target = $region57
        $region56: #{tpu_custom_call.1} parent=31 // pred_region
          %s919 = ssub.s32 4096, 4096
          %920 = vsyncadd [#allocation5], %s919
          %s921 = sshll.u32 [#allocation8], 4
          %s922 = int_to_ptr.vmem [resolvable:$true] %s921
          %927 = dma.vmem_to_hbm [thread:$0]  %s922, 4096, %s4, [#allocation5], 128, 128, 8
        $region57: #{tpu_custom_call.1} parent=31 // pred_fallthru
          _
        // Predicated region
        $region58: #{tpu_custom_call.1} parent=31 // pred_check
          %p928 = pneg %p118
        $region59: #{tpu_custom_call.1} parent=31 // pred_check_branch
          %930 = sbr.rel (%p928) target = $region61
        $region60: #{tpu_custom_call.1} parent=31 // pred_region
          %931 = dma.done [#allocation5], 4096
        $region61: #{tpu_custom_call.1} parent=31 // pred_fallthru
          _
      $region32: #{tpu_custom_call.1} parent=5 // pred_fallthru
        _
      %p932 = scmp.le.s32.totalorder 2, %s15
      // Predicated region
      $region62: #{tpu_custom_call.1} parent=5 // pred_check
        %p933 = pneg %p932
      $region63: #{tpu_custom_call.1} parent=5 // pred_check_branch
        %935 = sbr.rel (%p933) target = $region65
      $region64: #{tpu_custom_call.1} parent=5 // pred_region
        %s936 = ssub.s32 %s15, 2
      $region65: #{tpu_custom_call.1} parent=5 // pred_fallthru
        _
    $region6: #{tpu_custom_call.1} parent=1 // loop_footer
      %s19 = sadd.s32 1, %s15
    $region7: #{tpu_custom_call.1} parent=1 // loop_footer_branch
      %14 = sbr.rel target = $region3
    $region8: #{tpu_custom_call.1} parent=1 // loop_exit
      _
    %937 = vsyncpa [#allocation4], 1
    %s938 = scalar_lea.sflag [#allocation4], 1
    %939 = vsyncpa %s938, 1
    %940 = vsyncpa [#allocation7], 1
    %s941 = scalar_lea.sflag [#allocation7], 1
    %942 = vsyncpa %s941, 1
    %943 = vsyncpa [#allocation5], 1
    %s944 = scalar_lea.sflag [#allocation5], 1
    %945 = vsyncpa %s944, 1

</llo_original>
